<compile_context>
chip_gen: v7x
topology: tpu7x:2x2x1
jax: 0.10.0
libtpu: 0.0.40
codegen_flags: <defaults>
</compile_context>

<pallas_src>
import functools

import jax
import jax.numpy as jnp
from jax.experimental import pallas as pl
from jax.experimental.pallas import tpu as pltpu


def _global_avg_pool_kernel(x_ref, o_ref, acc_ref, *, hw_total, hw_tile):
    # x_ref: (row_tile, hw_tile) block; o_ref: (row_tile, 1); acc_ref: f32 scratch.
    k = pl.program_id(1)

    @pl.when(k == 0)
    def _():
        acc_ref[...] = jnp.zeros_like(acc_ref)

    x = x_ref[...]
    if hw_total % hw_tile != 0:
        # Ragged HW tail: the clipped DMA leaves stale data in the tail lanes
        # of the last block; zero them before accumulating.  The divisor below
        # always uses the true hw_total captured in the wrapper.
        col = jax.lax.broadcasted_iota(jnp.int32, x.shape, dimension=1)
        x = jnp.where(col + k * hw_tile < hw_total, x, jnp.zeros_like(x))

    # Accumulate in f32 without materializing a separate f32 copy of the tile.
    acc_ref[...] += jnp.sum(x, axis=-1, keepdims=True, dtype=jnp.float32)

    @pl.when(k == pl.num_programs(1) - 1)
    def _():
        o_ref[...] = (acc_ref[...] * (1.0 / hw_total)).astype(o_ref.dtype)


_TARGET_BLOCK_BYTES = 4 * 1024 * 1024   # ~4 MiB input block ≈ HBM roofline
_MIN_ROWS_FOR_HW_TILING = 256           # keep >=256 rows before tiling HW


def _vmem_limit_bytes():
    try:
        cap = int(pltpu.get_tpu_info().vmem_capacity_bytes)
    except Exception:
        cap = 64 * 1024 * 1024
    # Half of physical VMEM, capped at 64 MiB (v5e/v6e: 64 MiB, v7x: 32 MiB).
    return int(min(cap // 2, 64 * 1024 * 1024))


def select_adaptive_pool2d(x, pool_type="avg", flatten=False,
                           row_tile=None, hw_tile=None):
    """Global adaptive average pooling (output_size=1) matching the PyTorch module.

    x: (N, C, H, W).  Returns (N, C, 1, 1), or (N, C) if flatten.
    """
    assert pool_type == "avg", "only pool_type='avg' is implemented"
    # TODO(synk): pool_type in {'max', 'avgmax', 'catavgmax'} not implemented.
    N, C, H, W = x.shape
    R = N * C
    HW = H * W
    dtype_bytes = jnp.dtype(x.dtype).itemsize

    x2d = x.reshape(R, HW)

    # --- Choose the HW (lane) tile ------------------------------------------
    if hw_tile is None:
        max_hw_elems = max(
            128, (_TARGET_BLOCK_BYTES // dtype_bytes) // _MIN_ROWS_FOR_HW_TILING)
        if HW <= max_hw_elems:
            hw_tile = HW                              # whole row per block
        else:
            hw_tile = (max_hw_elems // 128) * 128     # multiple of 128
    num_hw_blocks = pl.cdiv(HW, hw_tile)

    # --- Choose the row (sublane) tile ---------------------------------------
    if row_tile is None:
        row_tile = max(8, ((_TARGET_BLOCK_BYTES // (hw_tile * dtype_bytes)) // 8) * 8)
        if row_tile >= R:
            row_tile = R                              # single block over all rows
    num_row_blocks = pl.cdiv(R, row_tile)

    kernel = functools.partial(
        _global_avg_pool_kernel, hw_total=HW, hw_tile=hw_tile)

    out2d = pl.pallas_call(
        kernel,
        out_shape=jax.ShapeDtypeStruct((R, 1), x.dtype),
        grid_spec=pltpu.PrefetchScalarGridSpec(
            num_scalar_prefetch=0,
            grid=(num_row_blocks, num_hw_blocks),
            in_specs=[pl.BlockSpec((row_tile, hw_tile), lambda i, k: (i, k))],
            out_specs=pl.BlockSpec((row_tile, 1), lambda i, k: (i, 0)),
            scratch_shapes=[pltpu.VMEM((row_tile, 1), jnp.float32)],
        ),
        compiler_params=pltpu.CompilerParams(
            dimension_semantics=("parallel", "arbitrary"),
            vmem_limit_bytes=_vmem_limit_bytes(),
        ),
        cost_estimate=pl.CostEstimate(
            flops=R * HW,
            transcendentals=0,
            bytes_accessed=R * HW * dtype_bytes + R * dtype_bytes,
        ),
    )(x2d)

    if flatten:
        return out2d.reshape(N, C)
    return out2d.reshape(N, C, 1, 1)


def _reference(x, flatten=False):
    y = jnp.mean(x, axis=(2, 3), keepdims=True)
    if flatten:
        y = y.reshape(x.shape[0], x.shape[1])
    return y


if __name__ == "__main__":
    key = jax.random.PRNGKey(0)

    # Primary shape from the module spec.
    N, C, H, W = 2, 4, 16, 16
    x = jax.random.normal(key, (N, C, H, W), dtype=jnp.float32)

    out = jax.block_until_ready(select_adaptive_pool2d(x, flatten=False))
    assert out.shape == (N, C, 1, 1), out.shape
    assert jnp.allclose(out, _reference(x, flatten=False), atol=1e-5, rtol=1e-5)

    out_f = jax.block_until_ready(select_adaptive_pool2d(x, flatten=True))
    assert out_f.shape == (N, C), out_f.shape
    assert jnp.allclose(out_f, _reference(x, flatten=True), atol=1e-5, rtol=1e-5)

    # Ragged row tail (R=15 with row_tile=8): exercises block clipping without pad.
    k1, k2 = jax.random.split(key)
    x_r = jax.random.normal(k1, (3, 5, 7, 7), dtype=jnp.float32)
    out_r = jax.block_until_ready(select_adaptive_pool2d(x_r, row_tile=8))
    assert out_r.shape == (3, 5, 1, 1), out_r.shape
    assert jnp.allclose(out_r, _reference(x_r), atol=1e-5, rtol=1e-5)

    # Ragged HW tail (HW=144 with hw_tile=128): exercises the in-kernel lane
    # mask and the multi-step accumulator (P3) path.
    x_h = jax.random.normal(k2, (2, 3, 12, 12), dtype=jnp.float32)
    out_h = jax.block_until_ready(select_adaptive_pool2d(x_h, hw_tile=128))
    assert out_h.shape == (2, 3, 1, 1), out_h.shape
    assert jnp.allclose(out_h, _reference(x_h), atol=1e-5, rtol=1e-5)

    print("KERNEL_OK")
</pallas_src>

<mosaic_0001>
module attributes {stable_mosaic.version = 11 : i64} {
  func.func @_global_avg_pool_kernel(%arg0: i32, %arg1: i32, %arg2: memref<8x256xf32, #tpu.memory_space<vmem>>, %arg3: memref<8x1xf32, #tpu.memory_space<vmem>>, %arg4: memref<8x1xf32, #tpu.memory_space<vmem>>) attributes {dimension_semantics = [#tpu.dimension_semantics<parallel>, #tpu.dimension_semantics<arbitrary>], iteration_bounds = array<i64: 1, 1>, scalar_prefetch = 0 : i64, scratch_operands = 1 : i64, tpu.core_type = #tpu.core_type<tc>, window_params = [{transform_indices = @transform_0, window_bounds = array<i64: 8, 256>}, {transform_indices = @transform_1, window_bounds = array<i64: 8, 1>}]} {
    %c0_i32 = arith.constant 0 : i32
    %0 = arith.cmpi eq, %arg1, %c0_i32 : i32
    %1 = arith.extui %0 : i1 to i32
    %c0_i32_0 = arith.constant 0 : i32
    %2 = arith.cmpi ne, %1, %c0_i32_0 : i32
    scf.if %2 {
      %cst_8 = arith.constant 0.000000e+00 : f32
      %12 = vector.broadcast %cst_8 : f32 to vector<8x1xf32>
      %c0_9 = arith.constant 0 : index
      %c0_10 = arith.constant 0 : index
      %13 = vector.load %arg4[%c0_9, %c0_10] : memref<8x1xf32, #tpu.memory_space<vmem>>, vector<8x1xf32>
      tpu.vector_store %arg4[%c0_9, %c0_10], %12 {strides = array<i32>} : memref<8x1xf32, #tpu.memory_space<vmem>>, vector<8x1xf32>,
    } else {
    }
    %c0 = arith.constant 0 : index
    %c0_1 = arith.constant 0 : index
    %3 = vector.load %arg2[%c0, %c0_1] : memref<8x256xf32, #tpu.memory_space<vmem>>, vector<8x256xf32>
    %c0_2 = arith.constant 0 : index
    %c0_3 = arith.constant 0 : index
    %4 = vector.load %arg4[%c0_2, %c0_3] : memref<8x1xf32, #tpu.memory_space<vmem>>, vector<8x1xf32>
    %cst = arith.constant dense<0.000000e+00> : vector<8xf32>
    %5 = vector.multi_reduction <add>, %3, %cst [1] : vector<8x256xf32> to vector<8xf32>
    %6 = vector.shape_cast %5 : vector<8xf32> to vector<8x1xf32>
    %7 = arith.addf %4, %6 : vector<8x1xf32>
    %c0_4 = arith.constant 0 : index
    %c0_5 = arith.constant 0 : index
    %8 = vector.load %arg4[%c0_4, %c0_5] : memref<8x1xf32, #tpu.memory_space<vmem>>, vector<8x1xf32>
    tpu.vector_store %arg4[%c0_4, %c0_5], %7 {strides = array<i32>} : memref<8x1xf32, #tpu.memory_space<vmem>>, vector<8x1xf32>,
    %c0_i32_6 = arith.constant 0 : i32
    %9 = arith.cmpi eq, %arg1, %c0_i32_6 : i32
    %10 = arith.extui %9 : i1 to i32
    %c0_i32_7 = arith.constant 0 : i32
    %11 = arith.cmpi ne, %10, %c0_i32_7 : i32
    scf.if %11 {
      %c0_8 = arith.constant 0 : index
      %c0_9 = arith.constant 0 : index
      %12 = vector.load %arg4[%c0_8, %c0_9] : memref<8x1xf32, #tpu.memory_space<vmem>>, vector<8x1xf32>
      %cst_10 = arith.constant 3.906250e-03 : f32
      %13 = vector.broadcast %cst_10 : f32 to vector<8x1xf32>
      %14 = arith.mulf %12, %13 : vector<8x1xf32>
      %c0_11 = arith.constant 0 : index
      %c0_12 = arith.constant 0 : index
      %15 = vector.load %arg3[%c0_11, %c0_12] : memref<8x1xf32, #tpu.memory_space<vmem>>, vector<8x1xf32>
      tpu.vector_store %arg3[%c0_11, %c0_12], %14 {strides = array<i32>} : memref<8x1xf32, #tpu.memory_space<vmem>>, vector<8x1xf32>,
    } else {
    }
    return
  }
  func.func @transform_0(%arg0: i32, %arg1: i32) -> (i32, i32) {
    %c0_i32 = arith.constant 0 : i32
    return %arg0, %arg1 : i32, i32
  }
  func.func @transform_1(%arg0: i32, %arg1: i32) -> (i32, i32) {
    %c0_i32 = arith.constant 0 : i32
    %c0_i32_0 = arith.constant 0 : i32
    return %arg0, %c0_i32 : i32, i32
  }
}

</mosaic_0001>

<llo_original>
// kernel: tpu_custom_call.1
$region0: #{tpu_custom_call.1}
  #allocation0 [shape = 'u32[]', space=smem, size = 0x4, offset = 0x4, fixed_abs, tag = 'smem constant byte address 0x4 - core index']
  #allocation1 [shape = 'u32[144,128]{1,0:T(1,128)}', space=vmem, size = 0x12000, scoped, tag = 'internal scratch']
  #allocation2 [shape = 'f32[8,1]{1,0:T(8,128)}', space=vmem, size = 0x1000, scoped, tag = 'scratch operand']
  %s0 = inlined_call_operand.hbm [shape: f32[8,256], index: 0, kind: input, shape index: {}]
  %s1 = inlined_call_operand.vmem [shape: f32[8,1], index: 1, kind: output, shape index: {}]
  %s2 = sld [smem:[#allocation0]]
  $region26: #{tpu_custom_call.1} parent=0
    _
  %s4 = ssub.s32 1, %s2
  %s5 = scalar_select 0, %s4, %s2
  $region1: #{tpu_custom_call.1} parent=0
    #allocation3 [shape = 'u8[8192]{0}', space=vmem, size = 0x2000, scoped, tag = 'input window, operand 0, single buffered']
    #allocation4 [shape = 's32[1]{0}', space=sflag, size = 0x4, scoped, tag = 'scoped memory for tpu_custom_call.1']
    %6 = vsyncpa [#allocation4], 0
    // Predicated region
    $region2: #{tpu_custom_call.1} parent=1 // pred_check
      _
    $region3: #{tpu_custom_call.1} parent=1 // pred_check_branch
      %8 = sbr.rel (0) target = $region5
    $region4: #{tpu_custom_call.1} parent=1 // pred_region
      %s10 = ssub.s32 256, 256
      %11 = vsyncadd [#allocation4], %s10
      %s13 = sshll.u32 [#allocation3], 4
      %s14 = int_to_ptr.vmem [resolvable:$true] %s13
      %16 = dma.hbm_to_vmem [thread:$0]  %s0, 256, %s14, [#allocation4]
    $region5: #{tpu_custom_call.1} parent=1 // pred_fallthru
      _
    // Predicated region
    $region6: #{tpu_custom_call.1} parent=1 // pred_check
      _
    $region7: #{tpu_custom_call.1} parent=1 // pred_check_branch
      %18 = sbr.rel (0) target = $region9
    $region8: #{tpu_custom_call.1} parent=1 // pred_region
      %19 = dma.done [#allocation4], 256
    $region9: #{tpu_custom_call.1} parent=1 // pred_fallthru
      _
    %p20 = scmp.eq.s32.totalorder 0, 0
    // Predicated region
    $region10: #{tpu_custom_call.1} parent=1 // pred_check
      %p21 = pneg %p20
    $region11: #{tpu_custom_call.1} parent=1 // pred_check_branch
      %23 = sbr.rel (%p21) target = $region13
    $region12: #{tpu_custom_call.1} parent=1 // pred_region
      %vm24 = vcmask 7168
      %25 = vst.msk [vmem:[#allocation2] sm:$0xff] %vm24, 0.0
    $region13: #{tpu_custom_call.1} parent=1 // pred_fallthru
      _
    %v26 = vld [vmem:[#allocation3] sm:$0xff]
    %v27 = vld [vmem:[#allocation3 + $0x8] sm:$0xff]
    %v28 = vld [vmem:[#allocation2] sm:$0xff]
    %v29 = vadd.f32 %v26, %v27
    %30 = vadd.xlane.f32.xlu0 %v29
    %v31 = vpop.xlane.xlu0 %30
    %v32 = vadd.f32 %v28, %v31
    %vm33 = vcmask 7168
    %34 = vst.msk [vmem:[#allocation2] sm:$0xff] %vm33, %v32
    // Predicated region
    $region14: #{tpu_custom_call.1} parent=1 // pred_check
      %p35 = pneg %p20
    $region15: #{tpu_custom_call.1} parent=1 // pred_check_branch
      %37 = sbr.rel (%p35) target = $region17
    $region16: #{tpu_custom_call.1} parent=1 // pred_region
      %v38 = vld [vmem:[#allocation2] sm:$0xff]
      %v39 = vmul.f32 %v38, 0.00390625
      %40 = vst.msk [vmem:[%s1] sm:$0xff] %vm33, %v39
    $region17: #{tpu_custom_call.1} parent=1 // pred_fallthru
      _
    // Predicated region
    $region18: #{tpu_custom_call.1} parent=1 // pred_check
      _
    $region19: #{tpu_custom_call.1} parent=1 // pred_check_branch
      %42 = sbr.rel (0) target = $region21
    $region20: #{tpu_custom_call.1} parent=1 // pred_region
      _
    $region21: #{tpu_custom_call.1} parent=1 // pred_fallthru
      _
    // Predicated region
    $region22: #{tpu_custom_call.1} parent=1 // pred_check
      _
    $region23: #{tpu_custom_call.1} parent=1 // pred_check_branch
      %44 = sbr.rel (0) target = $region25
    $region24: #{tpu_custom_call.1} parent=1 // pred_region
      _
    $region25: #{tpu_custom_call.1} parent=1 // pred_fallthru
      _
    %45 = vsyncpa [#allocation4], 1

</llo_original>
